<compile_context>
chip_gen: v7x
topology: tpu7x:2x2x1
jax: 0.10.0
libtpu: 0.0.40
codegen_flags: <defaults>
</compile_context>

<pallas_src>
import math

import jax
import jax.numpy as jnp
from jax import lax
from jax.experimental import pallas as pl
from jax.experimental.pallas import tpu as pltpu

INPUT_SIZE = 16
HIDDEN_DIM = 8
NOISE_LEVEL = 0.01
GROUP = 8                       # batch rows packed per grouped row (8 * 16 f32 = 128 lanes)


def _round_up(n, m):
    return ((n + m - 1) // m) * m


def _cdiv(a, b):
    return (a + b - 1) // b


# ---------------------------------------------------------------------------
# In-kernel counter-based PRNG (pure jnp -> lowers on TPU and in interpret mode).
# TODO(synk): statistically ~Gaussian (sum of 4 uniforms), not bit-identical to
# torch.randn_like's generator.
# ---------------------------------------------------------------------------
def _mix32(x):
    x = x ^ (x >> jnp.uint32(16))
    x = x * jnp.uint32(0x7FEB352D)
    x = x ^ (x >> jnp.uint32(15))
    x = x * jnp.uint32(0x846CA68B)
    x = x ^ (x >> jnp.uint32(16))
    return x


def _approx_normal(shape, seed_u32, row_offset_u32):
    rows = lax.broadcasted_iota(jnp.int32, shape, 0).astype(jnp.uint32) + row_offset_u32
    cols = lax.broadcasted_iota(jnp.int32, shape, 1).astype(jnp.uint32)
    ctr = rows * jnp.uint32(shape[1]) + cols                      # global element counter
    stream = _mix32(seed_u32 * jnp.uint32(0x9E3779B9) + jnp.uint32(0x85EBCA77))
    total = jnp.zeros(shape, jnp.float32)
    for k in range(4):                                            # 4 independent uniforms
        bits = _mix32((ctr * jnp.uint32(4) + jnp.uint32(k)) ^ stream)
        bits = _mix32(bits + jnp.uint32(0x9E3779B9))
        # top 24 bits -> exact int32 -> float32 in [0, 2^24)
        total = total + (bits >> jnp.uint32(8)).astype(jnp.int32).astype(jnp.float32)
    u_sum = total * jnp.float32(1.0 / (1 << 24))                  # sum of 4 x U[0,1)
    # mean 2, var 4/12 = 1/3  ->  scale to ~N(0,1)
    return (u_sum - 2.0) * jnp.float32(math.sqrt(3.0))


def _make_kernel(noise_level, tile_rows):
    """Kernel closed over a static noise_level (0.0 removes the PRNG path entirely)."""

    def kernel(seed_ref, xg_ref, w1_ref, b1_ref, w2_ref, b2_ref, enc_ref, dec_ref):
        xg = xg_ref[...]                                          # (TBg, 128) grouped tile
        if noise_level != 0.0:
            row_off = (pl.program_id(0) * tile_rows).astype(jnp.uint32)
            noise = _approx_normal(xg.shape, seed_ref[0].astype(jnp.uint32), row_off)
            xg = xg + jnp.float32(noise_level) * noise
        # encoder (block-diagonal expanded weights): enc_grp = relu(x_grp @ W1e + b1e)
        h = jnp.dot(xg, w1_ref[...], preferred_element_type=jnp.float32) + b1_ref[...]
        enc = jnp.maximum(h, 0.0)
        enc_ref[...] = enc.astype(enc_ref.dtype)
        # decoder: dec_grp = enc_grp @ W2e + b2e
        dec = jnp.dot(enc, w2_ref[...], preferred_element_type=jnp.float32) + b2_ref[...]
        dec_ref[...] = dec.astype(dec_ref.dtype)

    return kernel


def autoencoder_forward(x, w1, b1, w2, b2, *, noise_level=NOISE_LEVEL, seed=0,
                        block_b=16384, out_dtype=jnp.float32):
    """Autoencoder forward.

    x : (B, input_size)                      -- PyTorch layout
    w1: (hidden_dim, input_size) = fc1.weight   b1: (hidden_dim,) = fc1.bias
    w2: (input_size, hidden_dim) = fc2.weight   b2: (input_size,) = fc2.bias
    Returns (encode (B, hidden_dim), decode (B, input_size)).
    """
    B, D = x.shape
    H, D2 = w1.shape
    assert D2 == D and w2.shape == (D, H) and b1.shape == (H,) and b2.shape == (D,)

    # Grouped lane-dense layout: 8 batch rows * D features = 128 contiguous f32, so the
    # (B, 16) -> (B/8, 128) reshape is free (row-major bit-reinterpretation).
    Bp = _round_up(B, GROUP)
    if Bp != B:
        x = jnp.pad(x, ((0, Bp - B), (0, 0)))        # tiny tail pad, only in the ragged case
    Bg = Bp // GROUP
    xg = x.astype(jnp.float32).reshape(Bg, GROUP * D)             # (Bg, 128)

    # Block-diagonal expanded weights (32 KiB each) -> VMEM-resident, K=128 / K=64 matmuls.
    eye = jnp.eye(GROUP, dtype=jnp.float32)
    w1e = jnp.kron(eye, w1.T.astype(jnp.float32))                 # (128, 64)
    b1e = jnp.tile(b1.astype(jnp.float32), GROUP).reshape(1, GROUP * H)
    w2e = jnp.kron(eye, w2.T.astype(jnp.float32))                 # (64, 128)
    b2e = jnp.tile(b2.astype(jnp.float32), GROUP).reshape(1, GROUP * D)

    # Grouped-row tile: multiple of 8 sublanes; aim for >=2 grid steps (v7x megacore);
    # default block_b keeps double-buffered tiles well inside v5e's 16 MiB scoped VMEM.
    block_bg = max(8, block_b // GROUP)
    TBg = min(block_bg, _round_up(max(1, _cdiv(Bg, 2)), 8))
    if TBg >= Bg:
        TBg = Bg                                     # single full block (any size is legal)
    grid = (_cdiv(Bg, TBg),)                         # partial last block clipped by Pallas

    seed_arr = jnp.asarray([seed], dtype=jnp.int32)
    kernel = _make_kernel(float(noise_level), TBg)

    cost = pl.CostEstimate(flops=4 * B * D * H, transcendentals=0,
                           bytes_accessed=4 * B * (D + H + D))

    enc_g, dec_g = pl.pallas_call(
        kernel,
        out_shape=(
            jax.ShapeDtypeStruct((Bg, GROUP * H), out_dtype),
            jax.ShapeDtypeStruct((Bg, GROUP * D), out_dtype),
        ),
        grid_spec=pltpu.PrefetchScalarGridSpec(
            num_scalar_prefetch=1,                   # seed -> SMEM
            grid=grid,
            in_specs=[
                pl.BlockSpec((TBg, GROUP * D), lambda i, seed: (i, 0)),        # x grouped
                pl.BlockSpec((GROUP * D, GROUP * H), lambda i, seed: (0, 0)),  # W1e resident
                pl.BlockSpec((1, GROUP * H), lambda i, seed: (0, 0)),          # b1e resident
                pl.BlockSpec((GROUP * H, GROUP * D), lambda i, seed: (0, 0)),  # W2e resident
                pl.BlockSpec((1, GROUP * D), lambda i, seed: (0, 0)),          # b2e resident
            ],
            out_specs=[
                pl.BlockSpec((TBg, GROUP * H), lambda i, seed: (i, 0)),        # encode grouped
                pl.BlockSpec((TBg, GROUP * D), lambda i, seed: (i, 0)),        # decode grouped
            ],
        ),
        compiler_params=pltpu.CompilerParams(
            dimension_semantics=("parallel",),       # shard batch tiles across TCs on v7x
        ),
        cost_estimate=cost,
    )(seed_arr, xg, w1e, b1e, w2e, b2e)

    encode = enc_g.reshape(Bp, H)[:B]                # free reshape back to (B, H) / (B, D)
    decode = dec_g.reshape(Bp, D)[:B]
    return encode, decode


def init_params(key, input_size=INPUT_SIZE, hidden_dim=HIDDEN_DIM):
    """Deterministic init mimicking nn.Linear's U(-1/sqrt(in), 1/sqrt(in)), PyTorch layout."""
    k1, k2, k3, k4 = jax.random.split(key, 4)
    bound1 = input_size ** -0.5
    bound2 = hidden_dim ** -0.5
    w1 = jax.random.uniform(k1, (hidden_dim, input_size), jnp.float32, -bound1, bound1)
    b1 = jax.random.uniform(k2, (hidden_dim,), jnp.float32, -bound1, bound1)
    w2 = jax.random.uniform(k3, (input_size, hidden_dim), jnp.float32, -bound2, bound2)
    b2 = jax.random.uniform(k4, (input_size,), jnp.float32, -bound2, bound2)
    return w1, b1, w2, b2


if __name__ == "__main__":
    key = jax.random.PRNGKey(0)
    k_x, k_x2, k_params = jax.random.split(key, 3)
    w1, b1, w2, b2 = init_params(k_params)

    # --- check 1: noiseless path (noise_level=0.0), single tile, exact vs pure-JAX ref ---
    B = 8
    x = jax.random.normal(k_x, (B, INPUT_SIZE), jnp.float32)
    enc0, dec0 = autoencoder_forward(x, w1, b1, w2, b2, noise_level=0.0)
    jax.block_until_ready((enc0, dec0))
    enc_ref = jnp.maximum(x @ w1.T + b1, 0.0)
    dec_ref = enc_ref @ w2.T + b2
    assert enc0.shape == (B, HIDDEN_DIM) and dec0.shape == (B, INPUT_SIZE)
    assert jnp.allclose(enc0, enc_ref, atol=1e-5, rtol=1e-5)
    assert jnp.allclose(dec0, dec_ref, atol=1e-5, rtol=1e-5)

    # --- check 2: multi-tile path with a partial last block (B=300 -> Bg=38, TBg=16) ---
    B2 = 300
    x2 = jax.random.normal(k_x2, (B2, INPUT_SIZE), jnp.float32)
    enc2, dec2 = autoencoder_forward(x2, w1, b1, w2, b2, noise_level=0.0, block_b=128)
    jax.block_until_ready((enc2, dec2))
    enc2_ref = jnp.maximum(x2 @ w1.T + b1, 0.0)
    dec2_ref = enc2_ref @ w2.T + b2
    assert enc2.shape == (B2, HIDDEN_DIM) and dec2.shape == (B2, INPUT_SIZE)
    assert jnp.allclose(enc2, enc2_ref, atol=1e-5, rtol=1e-5)
    assert jnp.allclose(dec2, dec2_ref, atol=1e-5, rtol=1e-5)

    # --- check 3: full forward with in-kernel Gaussian corruption (noise_level=0.01) ---
    enc1, dec1 = autoencoder_forward(x, w1, b1, w2, b2, noise_level=NOISE_LEVEL, seed=1234)
    jax.block_until_ready((enc1, dec1))
    assert enc1.shape == (B, HIDDEN_DIM) and dec1.shape == (B, INPUT_SIZE)
    assert bool(jnp.all(jnp.isfinite(enc1))) and bool(jnp.all(jnp.isfinite(dec1)))
    # noise_level=0.01 -> output perturbation vs the noiseless reference must stay tiny.
    assert float(jnp.max(jnp.abs(dec1 - dec_ref))) < 0.5

    print("KERNEL_OK")
</pallas_src>

<mosaic_0001>
module attributes {stable_mosaic.version = 11 : i64} {
  func.func @kernel(%arg0: i32, %arg1: memref<1xi32, #tpu.memory_space<smem>>, %arg2: memref<1x128xf32, #tpu.memory_space<vmem>>, %arg3: memref<128x64xf32, #tpu.memory_space<vmem>>, %arg4: memref<1x64xf32, #tpu.memory_space<vmem>>, %arg5: memref<64x128xf32, #tpu.memory_space<vmem>>, %arg6: memref<1x128xf32, #tpu.memory_space<vmem>>, %arg7: memref<1x64xf32, #tpu.memory_space<vmem>>, %arg8: memref<1x128xf32, #tpu.memory_space<vmem>>) attributes {dimension_semantics = [#tpu.dimension_semantics<parallel>], iteration_bounds = array<i64: 1>, scalar_prefetch = 1 : i64, scratch_operands = 0 : i64, tpu.core_type = #tpu.core_type<tc>, window_params = [{transform_indices = @transform_0, window_bounds = array<i64: 1, 128>}, {pipeline_mode = #tpu.pipeline_mode<synchronous>, transform_indices = @transform_1, window_bounds = array<i64: 128, 64>}, {pipeline_mode = #tpu.pipeline_mode<synchronous>, transform_indices = @transform_2, window_bounds = array<i64: 1, 64>}, {pipeline_mode = #tpu.pipeline_mode<synchronous>, transform_indices = @transform_3, window_bounds = array<i64: 64, 128>}, {pipeline_mode = #tpu.pipeline_mode<synchronous>, transform_indices = @transform_4, window_bounds = array<i64: 1, 128>}, {transform_indices = @transform_5, window_bounds = array<i64: 1, 64>}, {transform_indices = @transform_6, window_bounds = array<i64: 1, 128>}]} {
    %c0 = arith.constant 0 : index
    %c0_0 = arith.constant 0 : index
    %0 = vector.load %arg2[%c0, %c0_0] : memref<1x128xf32, #tpu.memory_space<vmem>>, vector<1x128xf32>
    %c0_1 = arith.constant 0 : index
    %c0_2 = arith.constant 0 : index
    %1 = vector.load %arg3[%c0_1, %c0_2] : memref<128x64xf32, #tpu.memory_space<vmem>>, vector<128x64xf32>
    %cst = arith.constant dense<0.000000e+00> : vector<1x64xf32>
    %2 = tpu.matmul %0, %1, %cst {dimension_numbers = #tpu.dot_dimension_numbers<[1], [0], [0], [1], [0, 0, 1, 1], [], []>} : vector<1x128xf32>, vector<128x64xf32>, vector<1x64xf32> -> vector<1x64xf32>
    %c0_3 = arith.constant 0 : index
    %c0_4 = arith.constant 0 : index
    %3 = vector.load %arg4[%c0_3, %c0_4] : memref<1x64xf32, #tpu.memory_space<vmem>>, vector<1x64xf32>
    %4 = arith.addf %2, %3 : vector<1x64xf32>
    %cst_5 = arith.constant 0.000000e+00 : f32
    %5 = vector.broadcast %cst_5 : f32 to vector<1x64xf32>
    %6 = arith.maximumf %4, %5 : vector<1x64xf32>
    %c0_6 = arith.constant 0 : index
    %c0_7 = arith.constant 0 : index
    %7 = vector.load %arg7[%c0_6, %c0_7] : memref<1x64xf32, #tpu.memory_space<vmem>>, vector<1x64xf32>
    tpu.vector_store %arg7[%c0_6, %c0_7], %6 {strides = array<i32>} : memref<1x64xf32, #tpu.memory_space<vmem>>, vector<1x64xf32>,
    %c0_8 = arith.constant 0 : index
    %c0_9 = arith.constant 0 : index
    %8 = vector.load %arg5[%c0_8, %c0_9] : memref<64x128xf32, #tpu.memory_space<vmem>>, vector<64x128xf32>
    %cst_10 = arith.constant dense<0.000000e+00> : vector<1x128xf32>
    %9 = tpu.matmul %6, %8, %cst_10 {dimension_numbers = #tpu.dot_dimension_numbers<[1], [0], [0], [1], [0, 0, 1, 1], [], []>} : vector<1x64xf32>, vector<64x128xf32>, vector<1x128xf32> -> vector<1x128xf32>
    %c0_11 = arith.constant 0 : index
    %c0_12 = arith.constant 0 : index
    %10 = vector.load %arg6[%c0_11, %c0_12] : memref<1x128xf32, #tpu.memory_space<vmem>>, vector<1x128xf32>
    %11 = arith.addf %9, %10 : vector<1x128xf32>
    %c0_13 = arith.constant 0 : index
    %c0_14 = arith.constant 0 : index
    %12 = vector.load %arg8[%c0_13, %c0_14] : memref<1x128xf32, #tpu.memory_space<vmem>>, vector<1x128xf32>
    tpu.vector_store %arg8[%c0_13, %c0_14], %11 {strides = array<i32>} : memref<1x128xf32, #tpu.memory_space<vmem>>, vector<1x128xf32>,
    return
  }
  func.func @transform_0(%arg0: i32, %arg1: memref<1xi32, #tpu.memory_space<smem>>) -> (i32, i32) {
    %c0_i32 = arith.constant 0 : i32
    %c0_i32_0 = arith.constant 0 : i32
    return %arg0, %c0_i32 : i32, i32
  }
  func.func @transform_1(%arg0: i32, %arg1: memref<1xi32, #tpu.memory_space<smem>>) -> (i32, i32) {
    %c0_i32 = arith.constant 0 : i32
    %c0_i32_0 = arith.constant 0 : i32
    %c0_i32_1 = arith.constant 0 : i32
    return %c0_i32, %c0_i32_0 : i32, i32
  }
  func.func @transform_2(%arg0: i32, %arg1: memref<1xi32, #tpu.memory_space<smem>>) -> (i32, i32) {
    %c0_i32 = arith.constant 0 : i32
    %c0_i32_0 = arith.constant 0 : i32
    %c0_i32_1 = arith.constant 0 : i32
    return %c0_i32, %c0_i32_0 : i32, i32
  }
  func.func @transform_3(%arg0: i32, %arg1: memref<1xi32, #tpu.memory_space<smem>>) -> (i32, i32) {
    %c0_i32 = arith.constant 0 : i32
    %c0_i32_0 = arith.constant 0 : i32
    %c0_i32_1 = arith.constant 0 : i32
    return %c0_i32, %c0_i32_0 : i32, i32
  }
  func.func @transform_4(%arg0: i32, %arg1: memref<1xi32, #tpu.memory_space<smem>>) -> (i32, i32) {
    %c0_i32 = arith.constant 0 : i32
    %c0_i32_0 = arith.constant 0 : i32
    %c0_i32_1 = arith.constant 0 : i32
    return %c0_i32, %c0_i32_0 : i32, i32
  }
  func.func @transform_5(%arg0: i32, %arg1: memref<1xi32, #tpu.memory_space<smem>>) -> (i32, i32) {
    %c0_i32 = arith.constant 0 : i32
    %c0_i32_0 = arith.constant 0 : i32
    return %arg0, %c0_i32 : i32, i32
  }
  func.func @transform_6(%arg0: i32, %arg1: memref<1xi32, #tpu.memory_space<smem>>) -> (i32, i32) {
    %c0_i32 = arith.constant 0 : i32
    %c0_i32_0 = arith.constant 0 : i32
    return %arg0, %c0_i32 : i32, i32
  }
}

</mosaic_0001>

<llo_original>
// kernel: tpu_custom_call.1
$region0: #{tpu_custom_call.1}
  #allocation0 [shape = 'u32[]', space=smem, size = 0x4, offset = 0x4, fixed_abs, tag = 'smem constant byte address 0x4 - core index']
  #allocation1 [shape = 'u32[144,128]{1,0:T(1,128)}', space=vmem, size = 0x12000, scoped, tag = 'internal scratch']
  #allocation2 [shape = 's32[1]{0}', space=sflag, size = 0x4, scoped, tag = 'scoped memory for tpu_custom_call.1']
  #allocation3 [shape = 's32[1]{0:T(128)S(6)}', space=smem, size = 0x200, scoped, tag = 'prefetched SMEM operand 0']
  %s0 = inlined_call_operand.<no memory space> [shape: s32[1], index: 0, kind: input, shape index: {}]
  %s1 = inlined_call_operand.vmem [shape: f32[1,128], index: 1, kind: input, shape index: {}]
  %s2 = inlined_call_operand.vmem [shape: f32[128,64], index: 2, kind: input, shape index: {}]
  %s3 = inlined_call_operand.vmem [shape: f32[1,64], index: 3, kind: input, shape index: {}]
  %s4 = inlined_call_operand.vmem [shape: f32[64,128], index: 4, kind: input, shape index: {}]
  %s5 = inlined_call_operand.vmem [shape: f32[1,128], index: 5, kind: input, shape index: {}]
  %s6 = inlined_call_operand.hbm [shape: f32[1,64], index: 6, kind: output, shape index: {0}]
  %s7 = inlined_call_operand.hbm [shape: f32[1,128], index: 7, kind: output, shape index: {1}]
  %8 = xla_tuple %s6, %s7
  %s9 = sld [smem:[#allocation0]]
  $region38: #{tpu_custom_call.1} parent=0
    _
  %s11 = ssub.s32 1, %s9
  %s12 = scalar_select 0, %s11, %s9
  %13 = sst [smem:[#allocation3]] %s0
  $region1: #{tpu_custom_call.1} parent=0
    #allocation4 [shape = 'u8[512]{0}', space=vmem, size = 0x400, scoped, tag = 'output window, operand 0, single buffered']
    #allocation5 [shape = 's32[1]{0}', space=sflag, size = 0x4, scoped, tag = 'scoped memory for tpu_custom_call.1']
    #allocation6 [shape = 'u8[512]{0}', space=vmem, size = 0x400, scoped, tag = 'output window, operand 1, single buffered']
    #allocation7 [shape = 's32[1]{0}', space=sflag, size = 0x4, scoped, tag = 'scoped memory for tpu_custom_call.1']
    %14 = vsyncpa [#allocation5], 0
    %15 = vsyncpa [#allocation7], 0
    // Predicated region
    $region2: #{tpu_custom_call.1} parent=1 // pred_check
      _
    $region3: #{tpu_custom_call.1} parent=1 // pred_check_branch
      %17 = sbr.rel (0) target = $region5
    $region4: #{tpu_custom_call.1} parent=1 // pred_region
      _
    $region5: #{tpu_custom_call.1} parent=1 // pred_fallthru
      _
    // Predicated region
    $region6: #{tpu_custom_call.1} parent=1 // pred_check
      _
    $region7: #{tpu_custom_call.1} parent=1 // pred_check_branch
      %19 = sbr.rel (0) target = $region9
    $region8: #{tpu_custom_call.1} parent=1 // pred_region
      _
    $region9: #{tpu_custom_call.1} parent=1 // pred_fallthru
      _
    // Predicated region
    $region10: #{tpu_custom_call.1} parent=1 // pred_check
      _
    $region11: #{tpu_custom_call.1} parent=1 // pred_check_branch
      %21 = sbr.rel (0) target = $region13
    $region12: #{tpu_custom_call.1} parent=1 // pred_region
      _
    $region13: #{tpu_custom_call.1} parent=1 // pred_fallthru
      _
    // Predicated region
    $region14: #{tpu_custom_call.1} parent=1 // pred_check
      _
    $region15: #{tpu_custom_call.1} parent=1 // pred_check_branch
      %23 = sbr.rel (0) target = $region17
    $region16: #{tpu_custom_call.1} parent=1 // pred_region
      _
    $region17: #{tpu_custom_call.1} parent=1 // pred_fallthru
      _
    // Predicated region
    $region18: #{tpu_custom_call.1} parent=1 // pred_check
      _
    $region19: #{tpu_custom_call.1} parent=1 // pred_check_branch
      %25 = sbr.rel (0) target = $region21
    $region20: #{tpu_custom_call.1} parent=1 // pred_region
      _
    $region21: #{tpu_custom_call.1} parent=1 // pred_fallthru
      _
    %v26 = vld [vmem:[%s1] sm:$0x1]
    %v27 = vld [vmem:[%s2] sm:$0xff]
    %v28 = vld [vmem:[%s2 + $0x8] sm:$0xff]
    %v29 = vld [vmem:[%s2 + $0x10] sm:$0xff]
    %v30 = vld [vmem:[%s2 + $0x18] sm:$0xff]
    %v31 = vld [vmem:[%s2 + $0x20] sm:$0xff]
    %v32 = vld [vmem:[%s2 + $0x28] sm:$0xff]
    %v33 = vld [vmem:[%s2 + $0x30] sm:$0xff]
    %v34 = vld [vmem:[%s2 + $0x38] sm:$0xff]
    %v35 = vld [vmem:[%s2 + $0x40] sm:$0xff]
    %v36 = vld [vmem:[%s2 + $0x48] sm:$0xff]
    %v37 = vld [vmem:[%s2 + $0x50] sm:$0xff]
    %v38 = vld [vmem:[%s2 + $0x58] sm:$0xff]
    %v39 = vld [vmem:[%s2 + $0x60] sm:$0xff]
    %v40 = vld [vmem:[%s2 + $0x68] sm:$0xff]
    %v41 = vld [vmem:[%s2 + $0x70] sm:$0xff]
    %v42 = vld [vmem:[%s2 + $0x78] sm:$0xff]
    %v43 = vld [vmem:[%s3] sm:$0x1]
    %44 = vmatprep.subr.mxu0 0.0
    %45 = vmatpush1.msra.mxu0 %v27
    %46 = vmatprep.subr.mxu0 0.0
    %47 = vmatpush1.msra.mxu0 %v28
    %48 = vmatprep.subr.mxu0 0.0
    %49 = vmatpush1.msra.mxu0 %v29
    %50 = vmatprep.subr.mxu0 0.0
    %51 = vmatpush1.msra.mxu0 %v30
    %52 = vmatprep.subr.mxu0 0.0
    %53 = vmatpush1.msra.mxu0 %v31
    %54 = vmatprep.subr.mxu0 0.0
    %55 = vmatpush1.msra.mxu0 %v32
    %56 = vmatprep.subr.mxu0 0.0
    %57 = vmatpush1.msra.mxu0 %v33
    %58 = vmatprep.subr.mxu0 0.0
    %59 = vmatpush1.msra.mxu0 %v34
    %60 = vmatprep.subr.mxu0 0.0
    %61 = vmatpush1.msra.mxu0 %v35
    %62 = vmatprep.subr.mxu0 0.0
    %63 = vmatpush1.msra.mxu0 %v36
    %64 = vmatprep.subr.mxu0 0.0
    %65 = vmatpush1.msra.mxu0 %v37
    %66 = vmatprep.subr.mxu0 0.0
    %67 = vmatpush1.msra.mxu0 %v38
    %68 = vmatprep.subr.mxu0 0.0
    %69 = vmatpush1.msra.mxu0 %v39
    %70 = vmatprep.subr.mxu0 0.0
    %71 = vmatpush1.msra.mxu0 %v40
    %72 = vmatprep.subr.mxu0 0.0
    %73 = vmatpush1.msra.mxu0 %v41
    %74 = vmatprep.subr.mxu0 0.0
    %75 = vmatpush1.msra.mxu0 %v42
    %76 = vmatprep.subr.mxu0 0.0
    %77 = vmatpush1.msra.mxu0 0.0
    %78 = vmatprep.subr.mxu0 0.0
    %79 = vmatpush1.msra.mxu0 0.0
    %80 = vmatprep.subr.mxu0 0.0
    %81 = vmatpush1.msra.mxu0 0.0
    %82 = vmatprep.subr.mxu0 0.0
    %83 = vmatpush1.msra.mxu0 0.0
    %84 = vmatprep.subr.mxu0 0.0
    %85 = vmatpush1.msra.mxu0 0.0
    %86 = vmatprep.subr.mxu0 0.0
    %87 = vmatpush1.msra.mxu0 0.0
    %88 = vmatprep.subr.mxu0 0.0
    %89 = vmatpush1.msra.mxu0 0.0
    %90 = vmatprep.subr.mxu0 0.0
    %91 = vmatpush1.msra.mxu0 0.0
    %92 = vmatprep.subr.mxu0 0.0
    %93 = vmatpush1.msra.mxu0 0.0
    %94 = vmatprep.subr.mxu0 0.0
    %95 = vmatpush1.msra.mxu0 0.0
    %96 = vmatprep.subr.mxu0 0.0
    %97 = vmatpush1.msra.mxu0 0.0
    %98 = vmatprep.subr.mxu0 0.0
    %99 = vmatpush1.msra.mxu0 0.0
    %100 = vmatprep.subr.mxu0 0.0
    %101 = vmatpush1.msra.mxu0 0.0
    %102 = vmatprep.subr.mxu0 0.0
    %103 = vmatpush1.msra.mxu0 0.0
    %104 = vmatprep.subr.mxu0 0.0
    %105 = vmatpush1.msra.mxu0 0.0
    %106 = vmatprep.subr.mxu0 0.0
    %107 = vmatpush1.msra.mxu0 0.0
    %108 = vmatprep.mubr.f32.mxu0 0.0
    %109 = vmatmul.mubr.f32.gmra.mrb[0].mxu0 %v26
    %v110 = vpop.f32.mrb[0].mxu0
    %v111 = vadd.f32 %v43, %v110
    %v112 = vpop.f32.mrb[0].mxu0
    %113 = vdwg.mxu0
    %v114 = vmax.f32 %v111, 0.0
    %vm115 = vcmask 516096
    %116 = vst.msk [vmem:[#allocation4] sm:$0x1] %vm115, %v114
    %v117 = vld [vmem:[%s4] sm:$0xff]
    %v118 = vld [vmem:[%s4 + $0x8] sm:$0xff]
    %v119 = vld [vmem:[%s4 + $0x10] sm:$0xff]
    %v120 = vld [vmem:[%s4 + $0x18] sm:$0xff]
    %v121 = vld [vmem:[%s4 + $0x20] sm:$0xff]
    %v122 = vld [vmem:[%s4 + $0x28] sm:$0xff]
    %v123 = vld [vmem:[%s4 + $0x30] sm:$0xff]
    %v124 = vld [vmem:[%s4 + $0x38] sm:$0xff]
    %v125 = vld [vmem:[%s5] sm:$0x1]
    %vm126 = vcmask 523264
    %v128 = vsel %vm126, %v114, 0
    %130 = vmatprep.subr.mxu0 0.0
    %131 = vmatpush1.msra.mxu0 %v117
    %132 = vmatprep.subr.mxu0 0.0
    %133 = vmatpush1.msra.mxu0 %v118
    %134 = vmatprep.subr.mxu0 0.0
    %135 = vmatpush1.msra.mxu0 %v119
    %136 = vmatprep.subr.mxu0 0.0
    %137 = vmatpush1.msra.mxu0 %v120
    %138 = vmatprep.subr.mxu0 0.0
    %139 = vmatpush1.msra.mxu0 %v121
    %140 = vmatprep.subr.mxu0 0.0
    %141 = vmatpush1.msra.mxu0 %v122
    %142 = vmatprep.subr.mxu0 0.0
    %143 = vmatpush1.msra.mxu0 %v123
    %144 = vmatprep.subr.mxu0 0.0
    %145 = vmatpush1.msra.mxu0 %v124
    %146 = vmatprep.subr.mxu0 0.0
    %147 = vmatpush1.msra.mxu0 0.0
    %148 = vmatprep.subr.mxu0 0.0
    %149 = vmatpush1.msra.mxu0 0.0
    %150 = vmatprep.subr.mxu0 0.0
    %151 = vmatpush1.msra.mxu0 0.0
    %152 = vmatprep.subr.mxu0 0.0
    %153 = vmatpush1.msra.mxu0 0.0
    %154 = vmatprep.subr.mxu0 0.0
    %155 = vmatpush1.msra.mxu0 0.0
    %156 = vmatprep.subr.mxu0 0.0
    %157 = vmatpush1.msra.mxu0 0.0
    %158 = vmatprep.subr.mxu0 0.0
    %159 = vmatpush1.msra.mxu0 0.0
    %160 = vmatprep.subr.mxu0 0.0
    %161 = vmatpush1.msra.mxu0 0.0
    %162 = vmatprep.subr.mxu0 0.0
    %163 = vmatpush1.msra.mxu0 0.0
    %164 = vmatprep.subr.mxu0 0.0
    %165 = vmatpush1.msra.mxu0 0.0
    %166 = vmatprep.subr.mxu0 0.0
    %167 = vmatpush1.msra.mxu0 0.0
    %168 = vmatprep.subr.mxu0 0.0
    %169 = vmatpush1.msra.mxu0 0.0
    %170 = vmatprep.subr.mxu0 0.0
    %171 = vmatpush1.msra.mxu0 0.0
    %172 = vmatprep.subr.mxu0 0.0
    %173 = vmatpush1.msra.mxu0 0.0
    %174 = vmatprep.subr.mxu0 0.0
    %175 = vmatpush1.msra.mxu0 0.0
    %176 = vmatprep.subr.mxu0 0.0
    %177 = vmatpush1.msra.mxu0 0.0
    %178 = vmatprep.subr.mxu0 0.0
    %179 = vmatpush1.msra.mxu0 0.0
    %180 = vmatprep.subr.mxu0 0.0
    %181 = vmatpush1.msra.mxu0 0.0
    %182 = vmatprep.subr.mxu0 0.0
    %183 = vmatpush1.msra.mxu0 0.0
    %184 = vmatprep.subr.mxu0 0.0
    %185 = vmatpush1.msra.mxu0 0.0
    %186 = vmatprep.subr.mxu0 0.0
    %187 = vmatpush1.msra.mxu0 0.0
    %188 = vmatprep.subr.mxu0 0.0
    %189 = vmatpush1.msra.mxu0 0.0
    %190 = vmatprep.subr.mxu0 0.0
    %191 = vmatpush1.msra.mxu0 0.0
    %192 = vmatprep.subr.mxu0 0.0
    %193 = vmatpush1.msra.mxu0 0.0
    %194 = vmatprep.mubr.f32.mxu0 0.0
    %195 = vmatmul.mubr.f32.gmra.mrb[0].mxu0 %v128
    %v196 = vpop.f32.mrb[0].mxu0
    %v197 = vadd.f32 %v125, %v196
    %v198 = vpop.f32.mrb[0].mxu0
    %199 = vdwg.mxu0
    %200 = vst [vmem:[#allocation6] sm:$0x1] %v197
    // Predicated region
    $region22: #{tpu_custom_call.1} parent=1 // pred_check
      _
    $region23: #{tpu_custom_call.1} parent=1 // pred_check_branch
      %202 = sbr.rel (0) target = $region25
    $region24: #{tpu_custom_call.1} parent=1 // pred_region
      %s204 = ssub.s32 16, 16
      %205 = vsyncadd [#allocation5], %s204
      %s207 = sshll.u32 [#allocation4], 4
      %s208 = int_to_ptr.vmem [resolvable:$true] %s207
      %210 = dma.vmem_to_hbm [thread:$0]  %s208, 16, %s6, [#allocation5]
    $region25: #{tpu_custom_call.1} parent=1 // pred_fallthru
      _
    // Predicated region
    $region26: #{tpu_custom_call.1} parent=1 // pred_check
      _
    $region27: #{tpu_custom_call.1} parent=1 // pred_check_branch
      %212 = sbr.rel (0) target = $region29
    $region28: #{tpu_custom_call.1} parent=1 // pred_region
      %s214 = ssub.s32 16, 16
      %215 = vsyncadd [#allocation7], %s214
      %s217 = sshll.u32 [#allocation6], 4
      %s218 = int_to_ptr.vmem [resolvable:$true] %s217
      %220 = dma.vmem_to_hbm [thread:$0]  %s218, 16, %s7, [#allocation7]
    $region29: #{tpu_custom_call.1} parent=1 // pred_fallthru
      _
    // Predicated region
    $region30: #{tpu_custom_call.1} parent=1 // pred_check
      _
    $region31: #{tpu_custom_call.1} parent=1 // pred_check_branch
      %222 = sbr.rel (0) target = $region33
    $region32: #{tpu_custom_call.1} parent=1 // pred_region
      %223 = dma.done [#allocation5], 16
    $region33: #{tpu_custom_call.1} parent=1 // pred_fallthru
      _
    // Predicated region
    $region34: #{tpu_custom_call.1} parent=1 // pred_check
      _
    $region35: #{tpu_custom_call.1} parent=1 // pred_check_branch
      %225 = sbr.rel (0) target = $region37
    $region36: #{tpu_custom_call.1} parent=1 // pred_region
      %226 = dma.done [#allocation7], 16
    $region37: #{tpu_custom_call.1} parent=1 // pred_fallthru
      _
    %227 = vsyncpa [#allocation5], 1
    %228 = vsyncpa [#allocation7], 1

</llo_original>
